<compile_context>
chip_gen: v7x
topology: tpu7x:2x2x1
jax: 0.10.0
libtpu: 0.0.40
codegen_flags: <defaults>
</compile_context>

<pallas_src>
import numpy as np
import jax
import jax.numpy as jnp
from jax import lax
from jax.experimental import pallas as pl
from jax.experimental.pallas import tpu as pltpu


_TILE_TOKENS = 256                       # tokens gathered per grid step (multiple of 8)
_TABLE_VMEM_BUDGET_BYTES = 16 * 1024 * 1024   # resident-table cap; safe under v7x's 64 MiB/TC
_MAX_ONEHOT_VOCAB = 8192                 # bounds the (T, V) one-hot intermediate (<= 8 MiB f32)


def _round_up(x: int, m: int) -> int:
    return ((x + m - 1) // m) * m


# ---------------------------------------------------------------------------
# Primary path: VMEM-resident table + tiled one-hot MXU gather
# ---------------------------------------------------------------------------
def _embed_onehot_kernel(ids_ref, table_ref, out_ref):
    # ids_ref  : VMEM (T, 1) int32   token ids for this tile
    # table_ref: VMEM (V, D)         full embedding table (resident across the whole grid)
    # out_ref  : VMEM (T, D)         gathered embeddings for this tile
    T = out_ref.shape[0]
    V = table_ref.shape[0]
    ids = ids_ref[...]                                        # (T, 1), sublane-major
    col = lax.broadcasted_iota(jnp.int32, (T, V), 1)          # lane iota
    one_hot = (col == ids).astype(table_ref.dtype)            # (T, V)
    out_ref[...] = jnp.dot(
        one_hot, table_ref[...], preferred_element_type=jnp.float32
    ).astype(out_ref.dtype)


def _forward_resident(flat_ids, table, B, S, tile_tokens):
    N = flat_ids.shape[0]
    V, D = table.shape
    itemsize = jnp.dtype(table.dtype).itemsize

    T = min(tile_tokens, _round_up(N, 8))     # sublane-dense tile, no huge padding for tiny N
    n_tiles = -(-N // T)
    N_pad = n_tiles * T
    ids = flat_ids
    if N_pad != N:
        ids = jnp.pad(flat_ids, (0, N_pad - N))   # padded tokens gather row 0; sliced off below
    ids2d = ids.reshape(N_pad, 1)

    table_bytes = V * D * itemsize
    # table (single copy) + double-buffered (T, D) out + double-buffered (T, 1->128) ids
    # + (T, V) one-hot intermediate + slack.  Never below the default scoped limit.
    vmem_limit = (table_bytes + 2 * T * D * 4 + 2 * T * 128 * 4 + T * V * 4 + (4 << 20))
    vmem_limit = int(min(100 << 20, max(32 << 20, vmem_limit)))

    out = pl.pallas_call(
        _embed_onehot_kernel,
        out_shape=jax.ShapeDtypeStruct((N_pad, D), table.dtype),
        grid=(n_tiles,),
        in_specs=[
            pl.BlockSpec((T, 1), lambda t: (t, 0)),
            # Whole table resident in VMEM for the entire grid (loaded from HBM once).
            pl.BlockSpec(memory_space=pltpu.MemorySpace.VMEM),
        ],
        out_specs=pl.BlockSpec((T, D), lambda t: (t, 0)),
        compiler_params=pltpu.CompilerParams(
            dimension_semantics=("parallel",),     # tiles independent -> megacore on v7x
            vmem_limit_bytes=vmem_limit,
        ),
        cost_estimate=pl.CostEstimate(
            flops=2 * N_pad * V * D,
            transcendentals=0,
            bytes_accessed=N_pad * D * itemsize + table_bytes + N_pad * 4,
        ),
    )(ids2d, table)
    return out[:N].reshape(B, S, D)


# ---------------------------------------------------------------------------
# Fallback path: huge vocab, per-row DMA gather via scalar-prefetched indices
# ---------------------------------------------------------------------------
def _embed_row_gather_kernel(ids_ref, row_ref, out_ref):
    # ids_ref: SMEM (N,) int32 (scalar prefetch; consumed by the index_map, unused here)
    # row_ref: VMEM (1, D)     the gathered embedding row for this grid step
    # out_ref: VMEM (1, 1, D)  output slot for token t
    del ids_ref
    out_ref[...] = row_ref[...][None]


def _forward_row_dma(flat_ids, table, B, S):
    # TODO(synk): for very large vocabularies a manual multi-row DMA pipeline
    # (memory_space=pl.ANY + make_async_copy with 8-16 in-flight row copies) would hide HBM
    # latency much better than this depth-2 single-row pipeline.
    N = flat_ids.shape[0]
    V, D = table.shape
    itemsize = jnp.dtype(table.dtype).itemsize
    out = pl.pallas_call(
        _embed_row_gather_kernel,
        out_shape=jax.ShapeDtypeStruct((N, 1, D), table.dtype),
        grid_spec=pltpu.PrefetchScalarGridSpec(
            num_scalar_prefetch=1,
            grid=(N,),
            in_specs=[
                # Row gather: index_map returns the *element* row offset taken from the
                # prefetched index array (pl.Element pattern).
                pl.BlockSpec((pl.Element(1), D), lambda t, ids: (ids[t], 0)),
            ],
            out_specs=pl.BlockSpec((1, 1, D), lambda t, ids: (t, 0, 0)),
        ),
        compiler_params=pltpu.CompilerParams(
            dimension_semantics=("parallel",),
        ),
        cost_estimate=pl.CostEstimate(
            flops=0,
            transcendentals=0,
            bytes_accessed=2 * N * D * itemsize + N * 4,
        ),
    )(flat_ids, table)
    return out.reshape(B, S, D)


# ---------------------------------------------------------------------------
# Public wrapper (== nn.Embedding.from_pretrained(table)(idxes))
# ---------------------------------------------------------------------------
def word_embedding_forward(idxes: jax.Array, table: jax.Array, *,
                           tile_tokens: int = _TILE_TOKENS,
                           force_row_dma: bool = False) -> jax.Array:
    """Pallas equivalent of WordEmbedding.forward (embedding row gather)."""
    B, S = idxes.shape
    V, D = table.shape
    N = B * S
    # torch uses int64 indices; int32 is the TPU-native index width.
    # TODO(synk): a wrapper-side check for indices >= 2**31 would catch silent truncation.
    flat_ids = idxes.reshape(N).astype(jnp.int32)
    # torch nn.Embedding raises on out-of-range indices; clamp so an OOB index can never
    # drive an out-of-bounds DMA / garbage read.
    flat_ids = jnp.clip(flat_ids, 0, V - 1)

    table_bytes = V * D * jnp.dtype(table.dtype).itemsize
    use_resident = (not force_row_dma
                    and table_bytes <= _TABLE_VMEM_BUDGET_BYTES
                    and V <= _MAX_ONEHOT_VOCAB)
    if use_resident:
        return _forward_resident(flat_ids, table, B, S, tile_tokens)
    return _forward_row_dma(flat_ids, table, B, S)


def build_word2vec_table(vocab_size: int, dim: int, num_special: int) -> jnp.ndarray:
    """Deterministically mimic load_pretrained_embedding_ndarray's table layout:
    [pretrained vectors | OOV default (zeros) | PAD (zeros) | special tokens]."""
    rng = np.random.RandomState(0)
    vectors = rng.normal(loc=0.0, scale=1.0, size=(vocab_size, dim)).astype(np.float32)
    default_vec = np.zeros((1, dim), dtype=np.float32)            # oov_default='zero'
    pad_vec = np.zeros((1, dim), dtype=np.float32)
    special_vecs = rng.normal(loc=0.0, scale=0.01, size=(num_special, dim)).astype(np.float32)
    word2vec = np.vstack((vectors, default_vec, pad_vec, special_vecs)).astype(np.float32)
    return jnp.asarray(word2vec)


if __name__ == "__main__":
    # Small synthetic shapes: vocab=24, 6 special tokens -> 32 rows total; batch=2, seq=8.
    VOCAB, NUM_SPECIAL = 24, 6
    B, S = 2, 8
    key = jax.random.PRNGKey(0)

    # Case 1: lane-aligned embedding dim (D = 128) -> fully dense stores.
    DIM = 128
    table = build_word2vec_table(VOCAB, DIM, NUM_SPECIAL)          # (32, 128)
    total_rows = table.shape[0]
    idxes = jax.random.randint(key, (B, S), minval=0, maxval=total_rows, dtype=jnp.int32)

    out = jax.block_until_ready(word_embedding_forward(idxes, table))
    ref = jnp.take(table, idxes, axis=0)                           # nn.Embedding semantics
    assert out.shape == (B, S, DIM)
    np.testing.assert_allclose(np.asarray(out), np.asarray(ref), rtol=0, atol=0)

    # Case 2: narrow, non-lane-aligned dim (D = 32) is still bit-exact.
    table32 = build_word2vec_table(VOCAB, 32, NUM_SPECIAL)         # (32, 32)
    out32 = jax.block_until_ready(word_embedding_forward(idxes, table32))
    ref32 = jnp.take(table32, idxes, axis=0)
    np.testing.assert_allclose(np.asarray(out32), np.asarray(ref32), rtol=0, atol=0)

    # Case 3: exercise the huge-vocab per-row DMA fallback path on the same inputs.
    out_dma = jax.block_until_ready(word_embedding_forward(idxes, table, force_row_dma=True))
    np.testing.assert_allclose(np.asarray(out_dma), np.asarray(ref), rtol=0, atol=0)

    print("KERNEL_OK")
</pallas_src>

<mosaic_0001>
module attributes {stable_mosaic.version = 11 : i64} {
  func.func @_embed_onehot_kernel(%arg0: i32, %arg1: memref<16x1xi32, #tpu.memory_space<vmem>>, %arg2: memref<32x128xf32, #tpu.memory_space<vmem>>, %arg3: memref<16x128xf32, #tpu.memory_space<vmem>>) attributes {dimension_semantics = [#tpu.dimension_semantics<parallel>], iteration_bounds = array<i64: 1>, scalar_prefetch = 0 : i64, scratch_operands = 0 : i64, tpu.core_type = #tpu.core_type<tc>, window_params = [{transform_indices = @transform_0, window_bounds = array<i64: 16, 1>}, {pipeline_mode = #tpu.pipeline_mode<synchronous>, transform_indices = @transform_1, window_bounds = array<i64: 32, 128>}, {transform_indices = @transform_2, window_bounds = array<i64: 16, 128>}]} {
    %c0 = arith.constant 0 : index
    %c0_0 = arith.constant 0 : index
    %0 = vector.load %arg1[%c0, %c0_0] : memref<16x1xi32, #tpu.memory_space<vmem>>, vector<16x1xi32>
    %1 = tpu.iota {dimensions = array<i32: 1>} : vector<16x32xi32>
    %2 = vector.broadcast %0 : vector<16x1xi32> to vector<16x32xi32>
    %3 = arith.cmpi eq, %1, %2 : vector<16x32xi32>
    %4 = arith.extui %3 : vector<16x32xi1> to vector<16x32xi32>
    %5 = arith.sitofp %4 : vector<16x32xi32> to vector<16x32xf32>
    %c0_1 = arith.constant 0 : index
    %c0_2 = arith.constant 0 : index
    %6 = vector.load %arg2[%c0_1, %c0_2] : memref<32x128xf32, #tpu.memory_space<vmem>>, vector<32x128xf32>
    %cst = arith.constant dense<0.000000e+00> : vector<16x128xf32>
    %7 = tpu.matmul %5, %6, %cst {dimension_numbers = #tpu.dot_dimension_numbers<[1], [0], [0], [1], [0, 0, 1, 1], [], []>} : vector<16x32xf32>, vector<32x128xf32>, vector<16x128xf32> -> vector<16x128xf32>
    %c0_3 = arith.constant 0 : index
    %c0_4 = arith.constant 0 : index
    %8 = vector.load %arg3[%c0_3, %c0_4] : memref<16x128xf32, #tpu.memory_space<vmem>>, vector<16x128xf32>
    tpu.vector_store %arg3[%c0_3, %c0_4], %7 {strides = array<i32>} : memref<16x128xf32, #tpu.memory_space<vmem>>, vector<16x128xf32>,
    return
  }
  func.func @transform_0(%arg0: i32) -> (i32, i32) {
    %c0_i32 = arith.constant 0 : i32
    %c0_i32_0 = arith.constant 0 : i32
    return %arg0, %c0_i32 : i32, i32
  }
  func.func @transform_1(%arg0: i32) -> (i32, i32) {
    %c0_i32 = arith.constant 0 : i32
    %c0_i32_0 = arith.constant 0 : i32
    %c0_i32_1 = arith.constant 0 : i32
    return %c0_i32, %c0_i32_0 : i32, i32
  }
  func.func @transform_2(%arg0: i32) -> (i32, i32) {
    %c0_i32 = arith.constant 0 : i32
    %c0_i32_0 = arith.constant 0 : i32
    return %arg0, %c0_i32 : i32, i32
  }
}

</mosaic_0001>

<llo_original>
// kernel: tpu_custom_call.1
$region0: #{tpu_custom_call.1}
  #allocation0 [shape = 'u32[]', space=smem, size = 0x4, offset = 0x4, fixed_abs, tag = 'smem constant byte address 0x4 - core index']
  #allocation1 [shape = 'u32[144,128]{1,0:T(1,128)}', space=vmem, size = 0x12000, scoped, tag = 'internal scratch']
  %s0 = inlined_call_operand.vmem [shape: s32[16,1], index: 0, kind: input, shape index: {}]
  %s1 = inlined_call_operand.hbm [shape: f32[32,128], index: 1, kind: input, shape index: {}]
  %s2 = inlined_call_operand.hbm [shape: f32[16,128], index: 2, kind: output, shape index: {}]
  %s3 = sld [smem:[#allocation0]]
  $region22: #{tpu_custom_call.1} parent=0
    _
  %s5 = ssub.s32 1, %s3
  %s6 = scalar_select 0, %s5, %s3
  $region1: #{tpu_custom_call.1} parent=0
    #allocation2 [shape = 'u8[16384]{0}', space=vmem, size = 0x4000, scoped, tag = 'input window, operand 1, single buffered']
    #allocation3 [shape = 's32[1]{0}', space=sflag, size = 0x4, scoped, tag = 'scoped memory for tpu_custom_call.1']
    #allocation4 [shape = 's32[1]{0}', space=sflag, size = 0x4, scoped, tag = 'scoped memory for tpu_custom_call.1']
    #allocation5 [shape = 'u8[8192]{0}', space=vmem, size = 0x2000, scoped, tag = 'output window, operand 0, single buffered']
    %7 = vsyncpa [#allocation3], 0
    %8 = vsyncpa [#allocation4], 0
    // Predicated region
    $region2: #{tpu_custom_call.1} parent=1 // pred_check
      _
    $region3: #{tpu_custom_call.1} parent=1 // pred_check_branch
      %10 = sbr.rel (0) target = $region5
    $region4: #{tpu_custom_call.1} parent=1 // pred_region
      _
    $region5: #{tpu_custom_call.1} parent=1 // pred_fallthru
      _
    // Predicated region
    $region6: #{tpu_custom_call.1} parent=1 // pred_check
      _
    $region7: #{tpu_custom_call.1} parent=1 // pred_check_branch
      %12 = sbr.rel (0) target = $region9
    $region8: #{tpu_custom_call.1} parent=1 // pred_region
      %s14 = ssub.s32 512, 512
      %15 = vsyncadd [#allocation3], %s14
      %s16 = sshll.u32 [#allocation2], 4
      %s17 = int_to_ptr.vmem [resolvable:$true] %s16
      %22 = dma.hbm_to_vmem [thread:$0]  %s1, 512, %s17, [#allocation3], 128, 128, 8
    $region9: #{tpu_custom_call.1} parent=1 // pred_fallthru
      _
    // Predicated region
    $region10: #{tpu_custom_call.1} parent=1 // pred_check
      _
    $region11: #{tpu_custom_call.1} parent=1 // pred_check_branch
      %24 = sbr.rel (0) target = $region13
    $region12: #{tpu_custom_call.1} parent=1 // pred_region
      %25 = dma.done [#allocation3], 512
    $region13: #{tpu_custom_call.1} parent=1 // pred_fallthru
      _
    %v26 = vld [vmem:[%s0] sm:$0xff]
    %v27 = vld [vmem:[%s0 + $0x8] sm:$0xff]
    %v28 = vlaneseq
    %v29 = vand.u32 %v28, 127
    %30 = vset.pattern.permute.xlu0 0
    %31 = vperm.xlu0 %30, %v26
    %v32 = vpop.permute.xlu0 %31
    %33 = vset.pattern.permute.xlu0 0
    %34 = vperm.xlu0 %33, %v27
    %v35 = vpop.permute.xlu0 %34
    %vm36 = vcmp.eq.s32.totalorder %v29, %v32
    %vm37 = vcmp.eq.s32.totalorder %v29, %v35
    %v38 = vsel %vm36, 1, 0
    %v39 = vsel %vm37, 1, 0
    %v40 = vcvt.s32.f32 %v38
    %v41 = vcvt.s32.f32 %v39
    %v42 = vld [vmem:[#allocation2] sm:$0xff]
    %v43 = vld [vmem:[#allocation2 + $0x8] sm:$0xff]
    %v44 = vld [vmem:[#allocation2 + $0x10] sm:$0xff]
    %v45 = vld [vmem:[#allocation2 + $0x18] sm:$0xff]
    %vm46 = vcmask 261120
    %v48 = vsel %vm46, %v40, 0
    %v51 = vsel %vm46, %v41, 0
    %53 = vmatprep.subr.mxu0 0.0
    %54 = vmatpush1.msra.mxu0 %v42
    %55 = vmatprep.subr.mxu0 0.0
    %56 = vmatpush1.msra.mxu0 %v43
    %57 = vmatprep.subr.mxu0 0.0
    %58 = vmatpush1.msra.mxu0 %v44
    %59 = vmatprep.subr.mxu0 0.0
    %60 = vmatpush1.msra.mxu0 %v45
    %61 = vmatprep.subr.mxu0 0.0
    %62 = vmatpush1.msra.mxu0 0.0
    %63 = vmatprep.subr.mxu0 0.0
    %64 = vmatpush1.msra.mxu0 0.0
    %65 = vmatprep.subr.mxu0 0.0
    %66 = vmatpush1.msra.mxu0 0.0
    %67 = vmatprep.subr.mxu0 0.0
    %68 = vmatpush1.msra.mxu0 0.0
    %69 = vmatprep.subr.mxu0 0.0
    %70 = vmatpush1.msra.mxu0 0.0
    %71 = vmatprep.subr.mxu0 0.0
    %72 = vmatpush1.msra.mxu0 0.0
    %73 = vmatprep.subr.mxu0 0.0
    %74 = vmatpush1.msra.mxu0 0.0
    %75 = vmatprep.subr.mxu0 0.0
    %76 = vmatpush1.msra.mxu0 0.0
    %77 = vmatprep.subr.mxu0 0.0
    %78 = vmatpush1.msra.mxu0 0.0
    %79 = vmatprep.subr.mxu0 0.0
    %80 = vmatpush1.msra.mxu0 0.0
    %81 = vmatprep.subr.mxu0 0.0
    %82 = vmatpush1.msra.mxu0 0.0
    %83 = vmatprep.subr.mxu0 0.0
    %84 = vmatpush1.msra.mxu0 0.0
    %85 = vmatprep.subr.mxu0 0.0
    %86 = vmatpush1.msra.mxu0 0.0
    %87 = vmatprep.subr.mxu0 0.0
    %88 = vmatpush1.msra.mxu0 0.0
    %89 = vmatprep.subr.mxu0 0.0
    %90 = vmatpush1.msra.mxu0 0.0
    %91 = vmatprep.subr.mxu0 0.0
    %92 = vmatpush1.msra.mxu0 0.0
    %93 = vmatprep.subr.mxu0 0.0
    %94 = vmatpush1.msra.mxu0 0.0
    %95 = vmatprep.subr.mxu0 0.0
    %96 = vmatpush1.msra.mxu0 0.0
    %97 = vmatprep.subr.mxu0 0.0
    %98 = vmatpush1.msra.mxu0 0.0
    %99 = vmatprep.subr.mxu0 0.0
    %100 = vmatpush1.msra.mxu0 0.0
    %101 = vmatprep.subr.mxu0 0.0
    %102 = vmatpush1.msra.mxu0 0.0
    %103 = vmatprep.subr.mxu0 0.0
    %104 = vmatpush1.msra.mxu0 0.0
    %105 = vmatprep.subr.mxu0 0.0
    %106 = vmatpush1.msra.mxu0 0.0
    %107 = vmatprep.subr.mxu0 0.0
    %108 = vmatpush1.msra.mxu0 0.0
    %109 = vmatprep.subr.mxu0 0.0
    %110 = vmatpush1.msra.mxu0 0.0
    %111 = vmatprep.subr.mxu0 0.0
    %112 = vmatpush1.msra.mxu0 0.0
    %113 = vmatprep.subr.mxu0 0.0
    %114 = vmatpush1.msra.mxu0 0.0
    %115 = vmatprep.subr.mxu0 0.0
    %116 = vmatpush1.msra.mxu0 0.0
    %117 = vmatprep.mubr.f32.mxu0 0.0
    %118 = vmatmul.mubr.f32.gmra.mrb[0].mxu0 %v48
    %v119 = vpop.f32.mrb[0].mxu0
    %v120 = vadd.f32 0.0, %v119
    %v121 = vpop.f32.mrb[0].mxu0
    %122 = vmatprep.mubr.f32.mxu0 0.0
    %123 = vmatmul.mubr.f32.gmra.mrb[0].mxu0 %v51
    %v124 = vpop.f32.mrb[0].mxu0
    %v125 = vadd.f32 0.0, %v124
    %v126 = vpop.f32.mrb[0].mxu0
    %127 = vdwg.mxu0
    %128 = vst [vmem:[#allocation5] sm:$0xff] %v120
    %129 = vst [vmem:[#allocation5 + $0x8] sm:$0xff] %v125
    // Predicated region
    $region14: #{tpu_custom_call.1} parent=1 // pred_check
      _
    $region15: #{tpu_custom_call.1} parent=1 // pred_check_branch
      %131 = sbr.rel (0) target = $region17
    $region16: #{tpu_custom_call.1} parent=1 // pred_region
      %s133 = ssub.s32 256, 256
      %134 = vsyncadd [#allocation4], %s133
      %s135 = sshll.u32 [#allocation5], 4
      %s136 = int_to_ptr.vmem [resolvable:$true] %s135
      %141 = dma.vmem_to_hbm [thread:$0]  %s136, 256, %s2, [#allocation4], 128, 128, 8
    $region17: #{tpu_custom_call.1} parent=1 // pred_fallthru
      _
    // Predicated region
    $region18: #{tpu_custom_call.1} parent=1 // pred_check
      _
    $region19: #{tpu_custom_call.1} parent=1 // pred_check_branch
      %143 = sbr.rel (0) target = $region21
    $region20: #{tpu_custom_call.1} parent=1 // pred_region
      %144 = dma.done [#allocation4], 256
    $region21: #{tpu_custom_call.1} parent=1 // pred_fallthru
      _
    %145 = vsyncpa [#allocation3], 1
    %146 = vsyncpa [#allocation4], 1

</llo_original>
